<compile_context>
chip_gen: v7x
topology: tpu7x:2x2x1
jax: 0.10.0
libtpu: 0.0.40
codegen_flags: <defaults>
</compile_context>

<pallas_src>
import functools

import jax
import jax.numpy as jnp
from jax import lax
from jax.experimental import pallas as pl
from jax.experimental.pallas import tpu as pltpu

NEURONS_PER_LAYER_GENERATOR = 256
NEURONS_PER_LAYER_GENERATOR_EMBEDDING = 128
BN_EPS = 0.8          # nn.BatchNorm1d(num_features, 0.8) -> eps = 0.8
LRELU_SLOPE = 0.25    # nn.LeakyReLU(0.25)
LANE = 128            # TPU lane width (output padded to a multiple of this)


# ---------------------------------------------------------------------------
# Kernel
# ---------------------------------------------------------------------------
def _generator_kernel(kp_ref, nz_ref,
                      w1k_ref, w1n_ref, g1_ref, b1_ref,
                      w2_ref, g2_ref, b2_ref,
                      w3_ref, g3_ref, b3_ref,
                      w4_ref,
                      o_ref):
    """Full Generator forward for one independent batch (one grid point)."""
    cdt = w1k_ref.dtype  # MXU input dtype (bf16)

    def bn_lrelu(h, g, b):
        # BatchNorm1d (training mode, biased batch variance, eps=0.8) fused
        # into a single scale/shift, then LeakyReLU(0.25) as a single max.
        mean = jnp.mean(h, axis=0, keepdims=True)
        msq = jnp.mean(h * h, axis=0, keepdims=True)
        var = jnp.maximum(msq - mean * mean, 0.0)      # cancellation guard
        scale = g * lax.rsqrt(var + BN_EPS)            # rsqrt -> EUP slot
        shift = b - mean * scale
        hn = h * scale + shift                         # one fused mul+add
        return jnp.maximum(hn, LRELU_SLOPE * hn)       # LeakyReLU, 1 VALU op

    # Layer 1: torch.cat folded in by splitting w1 row-wise (two MXU pushes,
    # one f32 accumulator).  kp/nz arrive already in bf16.
    h = (jnp.dot(kp_ref[...], w1k_ref[...], preferred_element_type=jnp.float32)
         + jnp.dot(nz_ref[...], w1n_ref[...], preferred_element_type=jnp.float32))
    h = bn_lrelu(h, g1_ref[...], b1_ref[...])

    h = jnp.dot(h.astype(cdt), w2_ref[...], preferred_element_type=jnp.float32)
    h = bn_lrelu(h, g2_ref[...], b2_ref[...])

    h = jnp.dot(h.astype(cdt), w3_ref[...], preferred_element_type=jnp.float32)
    h = bn_lrelu(h, g3_ref[...], b3_ref[...])

    # Lane-dense (Bg, 128) store; wrapper slices back to image_size.
    o_ref[...] = jnp.dot(h.astype(cdt), w4_ref[...],
                         preferred_element_type=jnp.float32
                         ).astype(o_ref.dtype)


# ---------------------------------------------------------------------------
# Parameter prep (one time, outside the hot path)
# ---------------------------------------------------------------------------
def prepare_params(params, d_keypoints, matmul_dtype=jnp.bfloat16):
    """Split w1 for the in-kernel concat, cast weights to the MXU dtype, and
    zero-pad w4's output dim to a lane-dense multiple of 128.  BN gamma/beta
    stay f32 with shape (1, features)."""
    (w1, g1, b1, w2, g2, b2, w3, g3, b3, w4) = params
    w1k = w1[:d_keypoints].astype(matmul_dtype)
    w1n = w1[d_keypoints:].astype(matmul_dtype)
    out_dim = w4.shape[1]
    out_pad = max(LANE, ((out_dim + LANE - 1) // LANE) * LANE)
    w4p = jnp.zeros((w4.shape[0], out_pad), matmul_dtype
                    ).at[:, :out_dim].set(w4.astype(matmul_dtype))
    return (w1k, w1n, g1, b1,
            w2.astype(matmul_dtype), g2, b2,
            w3.astype(matmul_dtype), g3, b3,
            w4p)


# ---------------------------------------------------------------------------
# Wrappers
# ---------------------------------------------------------------------------
@functools.partial(jax.jit, static_argnames=("image_size",))
def _generator_forward_grouped(keypoints, noise, prepared_params, *, image_size):
    """keypoints/noise: (G, Bg, d) — G independent batches, one grid point each."""
    (w1k, w1n, g1, b1, w2, g2, b2, w3, g3, b3, w4p) = prepared_params
    G, Bg, d_kp = keypoints.shape
    d_nz = noise.shape[-1]
    H, E = w2.shape
    out_pad = w4p.shape[1]
    cdt = w1k.dtype

    # Cast activations once at the boundary (halved DMA, no in-kernel casts).
    kp = keypoints.astype(cdt)
    nz = noise.astype(cdt)

    def act_spec(d):
        # Block over the group axis; kernel sees a (Bg, d) tile.
        return pl.BlockSpec((pl.Squeezed(), Bg, d), lambda g: (g, 0, 0))

    def resident_spec(shape):
        # Constant block index along the grid -> DMA'd once, VMEM-resident.
        return pl.BlockSpec(shape, lambda g: tuple(0 for _ in shape))

    flops = 2 * G * Bg * (d_kp * H + d_nz * H + H * E + E * H + H * out_pad)
    bytes_weights = sum(int(w.size) * w.dtype.itemsize
                        for w in (w1k, w1n, g1, b1, w2, g2, b2, w3, g3, b3, w4p))
    bytes_act = (int(kp.size) * kp.dtype.itemsize
                 + int(nz.size) * nz.dtype.itemsize
                 + G * Bg * out_pad * 4)
    cost = pl.CostEstimate(flops=flops,
                           transcendentals=G * (2 * H + E),   # per-feature rsqrt
                           bytes_accessed=bytes_weights + bytes_act)

    out = pl.pallas_call(
        _generator_kernel,
        out_shape=jax.ShapeDtypeStruct((G, Bg, out_pad), jnp.float32),
        grid=(G,),
        in_specs=[act_spec(d_kp), act_spec(d_nz),
                  resident_spec(w1k.shape), resident_spec(w1n.shape),
                  resident_spec(g1.shape), resident_spec(b1.shape),
                  resident_spec(w2.shape),
                  resident_spec(g2.shape), resident_spec(b2.shape),
                  resident_spec(w3.shape),
                  resident_spec(g3.shape), resident_spec(b3.shape),
                  resident_spec(w4p.shape)],
        out_specs=pl.BlockSpec((pl.Squeezed(), Bg, out_pad),
                               lambda g: (g, 0, 0)),
        compiler_params=pltpu.CompilerParams(
            dimension_semantics=("parallel",)),   # v7x: shard groups over 2 TCs
        cost_estimate=cost,
    )(kp, nz, w1k, w1n, g1, b1, w2, g2, b2, w3, g3, b3, w4p)

    return out[..., :image_size]


def generator_forward(keypoints, noise, prepared_params, image_size):
    """Public entry.  keypoints/noise: (B, d) for a single batch (exact module
    semantics), or (G, B, d) for G independent batches amortized in one call."""
    squeeze = keypoints.ndim == 2
    if squeeze:
        keypoints = keypoints[None]
        noise = noise[None]
    out = _generator_forward_grouped(keypoints, noise, prepared_params,
                                     image_size=image_size)
    return out[0] if squeeze else out


# ---------------------------------------------------------------------------
# Synthetic parameters + references
# ---------------------------------------------------------------------------
def init_params(key, num_joints, nz):
    """Deterministic synthetic parameters matching the PyTorch module shapes.
    nn.Linear weight is (out, in); we store the transpose (in, out) so the
    kernel computes x @ W.  BatchNorm gamma=1, beta=0 (default init)."""
    image_size = num_joints * 2
    d_in = image_size + nz
    H = NEURONS_PER_LAYER_GENERATOR
    E = NEURONS_PER_LAYER_GENERATOR_EMBEDDING

    k1, k2, k3, k4 = jax.random.split(key, 4)
    w1 = jax.random.normal(k1, (d_in, H), jnp.float32) * 0.05
    w2 = jax.random.normal(k2, (H, E), jnp.float32) * 0.05
    w3 = jax.random.normal(k3, (E, H), jnp.float32) * 0.05
    w4 = jax.random.normal(k4, (H, image_size), jnp.float32) * 0.05

    g1 = jnp.ones((1, H), jnp.float32); b1 = jnp.zeros((1, H), jnp.float32)
    g2 = jnp.ones((1, E), jnp.float32); b2 = jnp.zeros((1, E), jnp.float32)
    g3 = jnp.ones((1, H), jnp.float32); b3 = jnp.zeros((1, H), jnp.float32)
    return (w1, g1, b1, w2, g2, b2, w3, g3, b3, w4)


def _reference_forward_f32(keypoints, noise, params):
    """Pure-JAX f32 reference with exact PyTorch forward semantics."""
    (w1, g1, b1, w2, g2, b2, w3, g3, b3, w4) = params
    x = jnp.concatenate([keypoints, noise], axis=-1).astype(jnp.float32)

    def bn_lrelu(h, g, b):
        mean = jnp.mean(h, axis=0, keepdims=True)
        var = jnp.mean((h - mean) ** 2, axis=0, keepdims=True)
        hn = (h - mean) / jnp.sqrt(var + BN_EPS) * g + b
        return jnp.where(hn > 0, hn, LRELU_SLOPE * hn)

    h = bn_lrelu(x @ w1, g1, b1)
    h = bn_lrelu(h @ w2, g2, b2)
    h = bn_lrelu(h @ w3, g3, b3)
    return h @ w4


def _reference_forward_matched(keypoints, noise, prepared_params, image_size):
    """Pure-JAX reference with the kernel's exact arithmetic (bf16 MXU inputs,
    f32 accumulation / BN) for a tight numerical check on one batch."""
    (w1k, w1n, g1, b1, w2, g2, b2, w3, g3, b3, w4p) = prepared_params
    cdt = w1k.dtype

    def bn_lrelu(h, g, b):
        mean = jnp.mean(h, axis=0, keepdims=True)
        msq = jnp.mean(h * h, axis=0, keepdims=True)
        var = jnp.maximum(msq - mean * mean, 0.0)
        scale = g * lax.rsqrt(var + BN_EPS)
        shift = b - mean * scale
        hn = h * scale + shift
        return jnp.maximum(hn, LRELU_SLOPE * hn)

    h = (jnp.dot(keypoints.astype(cdt), w1k, preferred_element_type=jnp.float32)
         + jnp.dot(noise.astype(cdt), w1n, preferred_element_type=jnp.float32))
    h = bn_lrelu(h, g1, b1)
    h = jnp.dot(h.astype(cdt), w2, preferred_element_type=jnp.float32)
    h = bn_lrelu(h, g2, b2)
    h = jnp.dot(h.astype(cdt), w3, preferred_element_type=jnp.float32)
    h = bn_lrelu(h, g3, b3)
    out = jnp.dot(h.astype(cdt), w4p, preferred_element_type=jnp.float32)
    return out[..., :image_size]


# ---------------------------------------------------------------------------
# Demo / checks
# ---------------------------------------------------------------------------
if __name__ == "__main__":
    num_joints = 8            # image_size = 16
    nz_dim = 16               # latent noise dimension
    batch = 8
    image_size = num_joints * 2

    key = jax.random.PRNGKey(0)
    kp_key, nz_key, p_key, grp_key = jax.random.split(key, 4)

    params = init_params(p_key, num_joints, nz_dim)
    prepared = prepare_params(params, d_keypoints=image_size)

    # --- single batch: exact module semantics (whole-batch BN statistics) ---
    keypoints = jax.random.normal(kp_key, (batch, image_size), jnp.float32)
    noise = jax.random.normal(nz_key, (batch, nz_dim), jnp.float32)

    out = generator_forward(keypoints, noise, prepared, image_size)
    out = jax.block_until_ready(out)
    assert out.shape == (batch, image_size)

    ref_m = _reference_forward_matched(keypoints, noise, prepared, image_size)
    assert jnp.allclose(out, ref_m, atol=2e-3, rtol=2e-3), (
        float(jnp.max(jnp.abs(out - ref_m))))

    ref_f32 = _reference_forward_f32(keypoints, noise, params)
    assert jnp.allclose(out, ref_f32, atol=5e-2, rtol=5e-2), (
        float(jnp.max(jnp.abs(out - ref_f32))))

    # --- G independent batches in one pallas_call (weights resident,
    #     grid axis parallel); each grid point uses its own batch stats ---
    G = 4
    kp_g = jax.random.normal(grp_key, (G, batch, image_size), jnp.float32)
    nz_g = jax.random.normal(jax.random.fold_in(grp_key, 1),
                             (G, batch, nz_dim), jnp.float32)
    out_g = jax.block_until_ready(
        generator_forward(kp_g, nz_g, prepared, image_size))
    assert out_g.shape == (G, batch, image_size)

    ref_g = jax.vmap(
        lambda k, n: _reference_forward_matched(k, n, prepared, image_size)
    )(kp_g, nz_g)
    assert jnp.allclose(out_g, ref_g, atol=2e-3, rtol=2e-3), (
        float(jnp.max(jnp.abs(out_g - ref_g))))

    print("KERNEL_OK")
</pallas_src>

<mosaic_0001>
module attributes {stable_mosaic.version = 11 : i64} {
  func.func @_generator_kernel(%arg0: i32, %arg1: memref<1x8x16xbf16, #tpu.memory_space<vmem>>, %arg2: memref<1x8x16xbf16, #tpu.memory_space<vmem>>, %arg3: memref<16x256xbf16, #tpu.memory_space<vmem>>, %arg4: memref<16x256xbf16, #tpu.memory_space<vmem>>, %arg5: memref<1x256xf32, #tpu.memory_space<vmem>>, %arg6: memref<1x256xf32, #tpu.memory_space<vmem>>, %arg7: memref<256x128xbf16, #tpu.memory_space<vmem>>, %arg8: memref<1x128xf32, #tpu.memory_space<vmem>>, %arg9: memref<1x128xf32, #tpu.memory_space<vmem>>, %arg10: memref<128x256xbf16, #tpu.memory_space<vmem>>, %arg11: memref<1x256xf32, #tpu.memory_space<vmem>>, %arg12: memref<1x256xf32, #tpu.memory_space<vmem>>, %arg13: memref<256x128xbf16, #tpu.memory_space<vmem>>, %arg14: memref<1x8x128xf32, #tpu.memory_space<vmem>>) attributes {dimension_semantics = [#tpu.dimension_semantics<parallel>], iteration_bounds = array<i64: 1>, scalar_prefetch = 0 : i64, scratch_operands = 0 : i64, tpu.core_type = #tpu.core_type<tc>, window_params = [{transform_indices = @transform_0, window_bounds = array<i64: 1, 8, 16>}, {transform_indices = @transform_1, window_bounds = array<i64: 1, 8, 16>}, {pipeline_mode = #tpu.pipeline_mode<synchronous>, transform_indices = @transform_2, window_bounds = array<i64: 16, 256>}, {pipeline_mode = #tpu.pipeline_mode<synchronous>, transform_indices = @transform_3, window_bounds = array<i64: 16, 256>}, {pipeline_mode = #tpu.pipeline_mode<synchronous>, transform_indices = @transform_4, window_bounds = array<i64: 1, 256>}, {pipeline_mode = #tpu.pipeline_mode<synchronous>, transform_indices = @transform_5, window_bounds = array<i64: 1, 256>}, {pipeline_mode = #tpu.pipeline_mode<synchronous>, transform_indices = @transform_6, window_bounds = array<i64: 256, 128>}, {pipeline_mode = #tpu.pipeline_mode<synchronous>, transform_indices = @transform_7, window_bounds = array<i64: 1, 128>}, {pipeline_mode = #tpu.pipeline_mode<synchronous>, transform_indices = @transform_8, window_bounds = array<i64: 1, 128>}, {pipeline_mode = #tpu.pipeline_mode<synchronous>, transform_indices = @transform_9, window_bounds = array<i64: 128, 256>}, {pipeline_mode = #tpu.pipeline_mode<synchronous>, transform_indices = @transform_10, window_bounds = array<i64: 1, 256>}, {pipeline_mode = #tpu.pipeline_mode<synchronous>, transform_indices = @transform_11, window_bounds = array<i64: 1, 256>}, {pipeline_mode = #tpu.pipeline_mode<synchronous>, transform_indices = @transform_12, window_bounds = array<i64: 256, 128>}, {transform_indices = @transform_13, window_bounds = array<i64: 1, 8, 128>}]} {
    %c0 = arith.constant 0 : index
    %c0_0 = arith.constant 0 : index
    %c0_1 = arith.constant 0 : index
    %0 = vector.load %arg1[%c0, %c0_0, %c0_1] : memref<1x8x16xbf16, #tpu.memory_space<vmem>>, vector<1x8x16xbf16>
    %1 = vector.shape_cast %0 : vector<1x8x16xbf16> to vector<8x16xbf16>
    %c0_2 = arith.constant 0 : index
    %c0_3 = arith.constant 0 : index
    %2 = vector.load %arg3[%c0_2, %c0_3] : memref<16x256xbf16, #tpu.memory_space<vmem>>, vector<16x256xbf16>
    %cst = arith.constant dense<0.000000e+00> : vector<8x256xf32>
    %3 = tpu.matmul %1, %2, %cst {dimension_numbers = #tpu.dot_dimension_numbers<[1], [0], [0], [1], [0, 0, 1, 1], [], []>} : vector<8x16xbf16>, vector<16x256xbf16>, vector<8x256xf32> -> vector<8x256xf32>
    %c0_4 = arith.constant 0 : index
    %c0_5 = arith.constant 0 : index
    %c0_6 = arith.constant 0 : index
    %4 = vector.load %arg2[%c0_4, %c0_5, %c0_6] : memref<1x8x16xbf16, #tpu.memory_space<vmem>>, vector<1x8x16xbf16>
    %5 = vector.shape_cast %4 : vector<1x8x16xbf16> to vector<8x16xbf16>
    %c0_7 = arith.constant 0 : index
    %c0_8 = arith.constant 0 : index
    %6 = vector.load %arg4[%c0_7, %c0_8] : memref<16x256xbf16, #tpu.memory_space<vmem>>, vector<16x256xbf16>
    %cst_9 = arith.constant dense<0.000000e+00> : vector<8x256xf32>
    %7 = tpu.matmul %5, %6, %cst_9 {dimension_numbers = #tpu.dot_dimension_numbers<[1], [0], [0], [1], [0, 0, 1, 1], [], []>} : vector<8x16xbf16>, vector<16x256xbf16>, vector<8x256xf32> -> vector<8x256xf32>
    %8 = arith.addf %3, %7 : vector<8x256xf32>
    %c0_10 = arith.constant 0 : index
    %c0_11 = arith.constant 0 : index
    %9 = vector.load %arg5[%c0_10, %c0_11] : memref<1x256xf32, #tpu.memory_space<vmem>>, vector<1x256xf32>
    %c0_12 = arith.constant 0 : index
    %c0_13 = arith.constant 0 : index
    %10 = vector.load %arg6[%c0_12, %c0_13] : memref<1x256xf32, #tpu.memory_space<vmem>>, vector<1x256xf32>
    %cst_14 = arith.constant dense<0.000000e+00> : vector<256xf32>
    %11 = vector.multi_reduction <add>, %8, %cst_14 [0] : vector<8x256xf32> to vector<256xf32>
    %12 = vector.shape_cast %11 : vector<256xf32> to vector<1x256xf32>
    %cst_15 = arith.constant 8.000000e+00 : f32
    %13 = vector.broadcast %cst_15 : f32 to vector<1x256xf32>
    %14 = arith.divf %12, %13 : vector<1x256xf32>
    %15 = arith.mulf %8, %8 : vector<8x256xf32>
    %cst_16 = arith.constant dense<0.000000e+00> : vector<256xf32>
    %16 = vector.multi_reduction <add>, %15, %cst_16 [0] : vector<8x256xf32> to vector<256xf32>
    %17 = vector.shape_cast %16 : vector<256xf32> to vector<1x256xf32>
    %cst_17 = arith.constant 8.000000e+00 : f32
    %18 = vector.broadcast %cst_17 : f32 to vector<1x256xf32>
    %19 = arith.divf %17, %18 : vector<1x256xf32>
    %20 = arith.mulf %14, %14 : vector<1x256xf32>
    %21 = arith.subf %19, %20 : vector<1x256xf32>
    %cst_18 = arith.constant 0.000000e+00 : f32
    %22 = vector.broadcast %cst_18 : f32 to vector<1x256xf32>
    %23 = arith.maximumf %21, %22 : vector<1x256xf32>
    %cst_19 = arith.constant 8.000000e-01 : f32
    %24 = vector.broadcast %cst_19 : f32 to vector<1x256xf32>
    %25 = arith.addf %23, %24 : vector<1x256xf32>
    %26 = math.rsqrt %25 : vector<1x256xf32>
    %27 = arith.mulf %9, %26 : vector<1x256xf32>
    %28 = arith.mulf %14, %27 : vector<1x256xf32>
    %29 = arith.subf %10, %28 : vector<1x256xf32>
    %30 = vector.broadcast %27 : vector<1x256xf32> to vector<8x256xf32>
    %31 = arith.mulf %8, %30 : vector<8x256xf32>
    %32 = vector.broadcast %29 : vector<1x256xf32> to vector<8x256xf32>
    %33 = arith.addf %31, %32 : vector<8x256xf32>
    %cst_20 = arith.constant 2.500000e-01 : f32
    %34 = vector.broadcast %cst_20 : f32 to vector<8x256xf32>
    %35 = arith.mulf %34, %33 : vector<8x256xf32>
    %36 = arith.maximumf %33, %35 : vector<8x256xf32>
    %37 = arith.truncf %36 : vector<8x256xf32> to vector<8x256xbf16>
    %c0_21 = arith.constant 0 : index
    %c0_22 = arith.constant 0 : index
    %38 = vector.load %arg7[%c0_21, %c0_22] : memref<256x128xbf16, #tpu.memory_space<vmem>>, vector<256x128xbf16>
    %cst_23 = arith.constant dense<0.000000e+00> : vector<8x128xf32>
    %39 = tpu.matmul %37, %38, %cst_23 {dimension_numbers = #tpu.dot_dimension_numbers<[1], [0], [0], [1], [0, 0, 1, 1], [], []>} : vector<8x256xbf16>, vector<256x128xbf16>, vector<8x128xf32> -> vector<8x128xf32>
    %c0_24 = arith.constant 0 : index
    %c0_25 = arith.constant 0 : index
    %40 = vector.load %arg8[%c0_24, %c0_25] : memref<1x128xf32, #tpu.memory_space<vmem>>, vector<1x128xf32>
    %c0_26 = arith.constant 0 : index
    %c0_27 = arith.constant 0 : index
    %41 = vector.load %arg9[%c0_26, %c0_27] : memref<1x128xf32, #tpu.memory_space<vmem>>, vector<1x128xf32>
    %cst_28 = arith.constant dense<0.000000e+00> : vector<128xf32>
    %42 = vector.multi_reduction <add>, %39, %cst_28 [0] : vector<8x128xf32> to vector<128xf32>
    %43 = vector.shape_cast %42 : vector<128xf32> to vector<1x128xf32>
    %cst_29 = arith.constant 8.000000e+00 : f32
    %44 = vector.broadcast %cst_29 : f32 to vector<1x128xf32>
    %45 = arith.divf %43, %44 : vector<1x128xf32>
    %46 = arith.mulf %39, %39 : vector<8x128xf32>
    %cst_30 = arith.constant dense<0.000000e+00> : vector<128xf32>
    %47 = vector.multi_reduction <add>, %46, %cst_30 [0] : vector<8x128xf32> to vector<128xf32>
    %48 = vector.shape_cast %47 : vector<128xf32> to vector<1x128xf32>
    %cst_31 = arith.constant 8.000000e+00 : f32
    %49 = vector.broadcast %cst_31 : f32 to vector<1x128xf32>
    %50 = arith.divf %48, %49 : vector<1x128xf32>
    %51 = arith.mulf %45, %45 : vector<1x128xf32>
    %52 = arith.subf %50, %51 : vector<1x128xf32>
    %cst_32 = arith.constant 0.000000e+00 : f32
    %53 = vector.broadcast %cst_32 : f32 to vector<1x128xf32>
    %54 = arith.maximumf %52, %53 : vector<1x128xf32>
    %cst_33 = arith.constant 8.000000e-01 : f32
    %55 = vector.broadcast %cst_33 : f32 to vector<1x128xf32>
    %56 = arith.addf %54, %55 : vector<1x128xf32>
    %57 = math.rsqrt %56 : vector<1x128xf32>
    %58 = arith.mulf %40, %57 : vector<1x128xf32>
    %59 = arith.mulf %45, %58 : vector<1x128xf32>
    %60 = arith.subf %41, %59 : vector<1x128xf32>
    %61 = vector.broadcast %58 : vector<1x128xf32> to vector<8x128xf32>
    %62 = arith.mulf %39, %61 : vector<8x128xf32>
    %63 = vector.broadcast %60 : vector<1x128xf32> to vector<8x128xf32>
    %64 = arith.addf %62, %63 : vector<8x128xf32>
    %cst_34 = arith.constant 2.500000e-01 : f32
    %65 = vector.broadcast %cst_34 : f32 to vector<8x128xf32>
    %66 = arith.mulf %65, %64 : vector<8x128xf32>
    %67 = arith.maximumf %64, %66 : vector<8x128xf32>
    %68 = arith.truncf %67 : vector<8x128xf32> to vector<8x128xbf16>
    %c0_35 = arith.constant 0 : index
    %c0_36 = arith.constant 0 : index
    %69 = vector.load %arg10[%c0_35, %c0_36] : memref<128x256xbf16, #tpu.memory_space<vmem>>, vector<128x256xbf16>
    %cst_37 = arith.constant dense<0.000000e+00> : vector<8x256xf32>
    %70 = tpu.matmul %68, %69, %cst_37 {dimension_numbers = #tpu.dot_dimension_numbers<[1], [0], [0], [1], [0, 0, 1, 1], [], []>} : vector<8x128xbf16>, vector<128x256xbf16>, vector<8x256xf32> -> vector<8x256xf32>
    %c0_38 = arith.constant 0 : index
    %c0_39 = arith.constant 0 : index
    %71 = vector.load %arg11[%c0_38, %c0_39] : memref<1x256xf32, #tpu.memory_space<vmem>>, vector<1x256xf32>
    %c0_40 = arith.constant 0 : index
    %c0_41 = arith.constant 0 : index
    %72 = vector.load %arg12[%c0_40, %c0_41] : memref<1x256xf32, #tpu.memory_space<vmem>>, vector<1x256xf32>
    %cst_42 = arith.constant dense<0.000000e+00> : vector<256xf32>
    %73 = vector.multi_reduction <add>, %70, %cst_42 [0] : vector<8x256xf32> to vector<256xf32>
    %74 = vector.shape_cast %73 : vector<256xf32> to vector<1x256xf32>
    %cst_43 = arith.constant 8.000000e+00 : f32
    %75 = vector.broadcast %cst_43 : f32 to vector<1x256xf32>
    %76 = arith.divf %74, %75 : vector<1x256xf32>
    %77 = arith.mulf %70, %70 : vector<8x256xf32>
    %cst_44 = arith.constant dense<0.000000e+00> : vector<256xf32>
    %78 = vector.multi_reduction <add>, %77, %cst_44 [0] : vector<8x256xf32> to vector<256xf32>
    %79 = vector.shape_cast %78 : vector<256xf32> to vector<1x256xf32>
    %cst_45 = arith.constant 8.000000e+00 : f32
    %80 = vector.broadcast %cst_45 : f32 to vector<1x256xf32>
    %81 = arith.divf %79, %80 : vector<1x256xf32>
    %82 = arith.mulf %76, %76 : vector<1x256xf32>
    %83 = arith.subf %81, %82 : vector<1x256xf32>
    %cst_46 = arith.constant 0.000000e+00 : f32
    %84 = vector.broadcast %cst_46 : f32 to vector<1x256xf32>
    %85 = arith.maximumf %83, %84 : vector<1x256xf32>
    %cst_47 = arith.constant 8.000000e-01 : f32
    %86 = vector.broadcast %cst_47 : f32 to vector<1x256xf32>
    %87 = arith.addf %85, %86 : vector<1x256xf32>
    %88 = math.rsqrt %87 : vector<1x256xf32>
    %89 = arith.mulf %71, %88 : vector<1x256xf32>
    %90 = arith.mulf %76, %89 : vector<1x256xf32>
    %91 = arith.subf %72, %90 : vector<1x256xf32>
    %92 = vector.broadcast %89 : vector<1x256xf32> to vector<8x256xf32>
    %93 = arith.mulf %70, %92 : vector<8x256xf32>
    %94 = vector.broadcast %91 : vector<1x256xf32> to vector<8x256xf32>
    %95 = arith.addf %93, %94 : vector<8x256xf32>
    %cst_48 = arith.constant 2.500000e-01 : f32
    %96 = vector.broadcast %cst_48 : f32 to vector<8x256xf32>
    %97 = arith.mulf %96, %95 : vector<8x256xf32>
    %98 = arith.maximumf %95, %97 : vector<8x256xf32>
    %99 = arith.truncf %98 : vector<8x256xf32> to vector<8x256xbf16>
    %c0_49 = arith.constant 0 : index
    %c0_50 = arith.constant 0 : index
    %100 = vector.load %arg13[%c0_49, %c0_50] : memref<256x128xbf16, #tpu.memory_space<vmem>>, vector<256x128xbf16>
    %cst_51 = arith.constant dense<0.000000e+00> : vector<8x128xf32>
    %101 = tpu.matmul %99, %100, %cst_51 {dimension_numbers = #tpu.dot_dimension_numbers<[1], [0], [0], [1], [0, 0, 1, 1], [], []>} : vector<8x256xbf16>, vector<256x128xbf16>, vector<8x128xf32> -> vector<8x128xf32>
    %c0_52 = arith.constant 0 : index
    %c0_53 = arith.constant 0 : index
    %c0_54 = arith.constant 0 : index
    %102 = vector.load %arg14[%c0_52, %c0_53, %c0_54] : memref<1x8x128xf32, #tpu.memory_space<vmem>>, vector<1x8x128xf32>
    %103 = vector.shape_cast %102 : vector<1x8x128xf32> to vector<8x128xf32>
    %104 = vector.shape_cast %101 : vector<8x128xf32> to vector<1x8x128xf32>
    tpu.vector_store %arg14[%c0_52, %c0_53, %c0_54], %104 {strides = array<i32>} : memref<1x8x128xf32, #tpu.memory_space<vmem>>, vector<1x8x128xf32>,
    return
  }
  func.func @transform_0(%arg0: i32) -> (i32, i32, i32) {
    %c0_i32 = arith.constant 0 : i32
    %c0_i32_0 = arith.constant 0 : i32
    %c0_i32_1 = arith.constant 0 : i32
    return %arg0, %c0_i32, %c0_i32_0 : i32, i32, i32
  }
  func.func @transform_1(%arg0: i32) -> (i32, i32, i32) {
    %c0_i32 = arith.constant 0 : i32
    %c0_i32_0 = arith.constant 0 : i32
    %c0_i32_1 = arith.constant 0 : i32
    return %arg0, %c0_i32, %c0_i32_0 : i32, i32, i32
  }
  func.func @transform_2(%arg0: i32) -> (i32, i32) {
    %c0_i32 = arith.constant 0 : i32
    %c0_i32_0 = arith.constant 0 : i32
    %c0_i32_1 = arith.constant 0 : i32
    return %c0_i32, %c0_i32_0 : i32, i32
  }
  func.func @transform_3(%arg0: i32) -> (i32, i32) {
    %c0_i32 = arith.constant 0 : i32
    %c0_i32_0 = arith.constant 0 : i32
    %c0_i32_1 = arith.constant 0 : i32
    return %c0_i32, %c0_i32_0 : i32, i32
  }
  func.func @transform_4(%arg0: i32) -> (i32, i32) {
    %c0_i32 = arith.constant 0 : i32
    %c0_i32_0 = arith.constant 0 : i32
    %c0_i32_1 = arith.constant 0 : i32
    return %c0_i32, %c0_i32_0 : i32, i32
  }
  func.func @transform_5(%arg0: i32) -> (i32, i32) {
    %c0_i32 = arith.constant 0 : i32
    %c0_i32_0 = arith.constant 0 : i32
    %c0_i32_1 = arith.constant 0 : i32
    return %c0_i32, %c0_i32_0 : i32, i32
  }
  func.func @transform_6(%arg0: i32) -> (i32, i32) {
    %c0_i32 = arith.constant 0 : i32
    %c0_i32_0 = arith.constant 0 : i32
    %c0_i32_1 = arith.constant 0 : i32
    return %c0_i32, %c0_i32_0 : i32, i32
  }
  func.func @transform_7(%arg0: i32) -> (i32, i32) {
    %c0_i32 = arith.constant 0 : i32
    %c0_i32_0 = arith.constant 0 : i32
    %c0_i32_1 = arith.constant 0 : i32
    return %c0_i32, %c0_i32_0 : i32, i32
  }
  func.func @transform_8(%arg0: i32) -> (i32, i32) {
    %c0_i32 = arith.constant 0 : i32
    %c0_i32_0 = arith.constant 0 : i32
    %c0_i32_1 = arith.constant 0 : i32
    return %c0_i32, %c0_i32_0 : i32, i32
  }
  func.func @transform_9(%arg0: i32) -> (i32, i32) {
    %c0_i32 = arith.constant 0 : i32
    %c0_i32_0 = arith.constant 0 : i32
    %c0_i32_1 = arith.constant 0 : i32
    return %c0_i32, %c0_i32_0 : i32, i32
  }
  func.func @transform_10(%arg0: i32) -> (i32, i32) {
    %c0_i32 = arith.constant 0 : i32
    %c0_i32_0 = arith.constant 0 : i32
    %c0_i32_1 = arith.constant 0 : i32
    return %c0_i32, %c0_i32_0 : i32, i32
  }
  func.func @transform_11(%arg0: i32) -> (i32, i32) {
    %c0_i32 = arith.constant 0 : i32
    %c0_i32_0 = arith.constant 0 : i32
    %c0_i32_1 = arith.constant 0 : i32
    return %c0_i32, %c0_i32_0 : i32, i32
  }
  func.func @transform_12(%arg0: i32) -> (i32, i32) {
    %c0_i32 = arith.constant 0 : i32
    %c0_i32_0 = arith.constant 0 : i32
    %c0_i32_1 = arith.constant 0 : i32
    return %c0_i32, %c0_i32_0 : i32, i32
  }
  func.func @transform_13(%arg0: i32) -> (i32, i32, i32) {
    %c0_i32 = arith.constant 0 : i32
    %c0_i32_0 = arith.constant 0 : i32
    %c0_i32_1 = arith.constant 0 : i32
    return %arg0, %c0_i32, %c0_i32_0 : i32, i32, i32
  }
}

</mosaic_0001>

<llo_original>
// kernel: _generator_forward_grouped.1
$region0: #{_generator_forward_grouped.1}
  #allocation0 [shape = 'u32[]', space=smem, size = 0x4, offset = 0x4, fixed_abs, tag = 'smem constant byte address 0x4 - core index']
  #allocation1 [shape = 'u32[144,128]{1,0:T(1,128)}', space=vmem, size = 0x12000, scoped, tag = 'internal scratch']
  %s0 = inlined_call_operand.vmem [shape: bf16[1,8,16], index: 0, kind: input, shape index: {}]
  %s1 = inlined_call_operand.vmem [shape: bf16[1,8,16], index: 1, kind: input, shape index: {}]
  %s2 = inlined_call_operand.vmem [shape: bf16[16,256], index: 2, kind: input, shape index: {}]
  %s3 = inlined_call_operand.vmem [shape: bf16[16,256], index: 3, kind: input, shape index: {}]
  %s4 = inlined_call_operand.vmem [shape: f32[1,256], index: 4, kind: input, shape index: {}]
  %s5 = inlined_call_operand.vmem [shape: f32[1,256], index: 5, kind: input, shape index: {}]
  %s6 = inlined_call_operand.hbm [shape: bf16[256,128], index: 6, kind: input, shape index: {}]
  %s7 = inlined_call_operand.vmem [shape: f32[1,128], index: 7, kind: input, shape index: {}]
  %s8 = inlined_call_operand.vmem [shape: f32[1,128], index: 8, kind: input, shape index: {}]
  %s9 = inlined_call_operand.hbm [shape: bf16[128,256], index: 9, kind: input, shape index: {}]
  %s10 = inlined_call_operand.vmem [shape: f32[1,256], index: 10, kind: input, shape index: {}]
  %s11 = inlined_call_operand.vmem [shape: f32[1,256], index: 11, kind: input, shape index: {}]
  %s12 = inlined_call_operand.hbm [shape: bf16[256,128], index: 12, kind: input, shape index: {}]
  %s13 = inlined_call_operand.hbm [shape: f32[1,8,128], index: 13, kind: output, shape index: {}]
  %s14 = sld [smem:[#allocation0]]
  $region74: #{_generator_forward_grouped.1} parent=0
    _
  %s16 = ssub.s32 1, %s14
  %s17 = scalar_select 0, %s16, %s14
  $region1: #{_generator_forward_grouped.1} parent=0
    #allocation2 [shape = 'u8[65536]{0}', space=vmem, size = 0x10000, scoped, tag = 'input window, operand 6, single buffered']
    #allocation3 [shape = 's32[1]{0}', space=sflag, size = 0x4, scoped, tag = 'scoped memory for _generator_forward_grouped.1']
    #allocation4 [shape = 's32[1]{0}', space=sflag, size = 0x4, scoped, tag = 'scoped memory for _generator_forward_grouped.1']
    #allocation5 [shape = 'u8[65536]{0}', space=vmem, size = 0x10000, scoped, tag = 'input window, operand 9, single buffered']
    #allocation6 [shape = 's32[1]{0}', space=sflag, size = 0x4, scoped, tag = 'scoped memory for _generator_forward_grouped.1']
    #allocation7 [shape = 'u8[65536]{0}', space=vmem, size = 0x10000, scoped, tag = 'input window, operand 12, single buffered']
    #allocation8 [shape = 'u8[4096]{0}', space=vmem, size = 0x1000, scoped, tag = 'output window, operand 0, single buffered']
    %18 = vsyncpa [#allocation3], 0
    %19 = vsyncpa [#allocation6], 0
    %20 = vsyncpa [#allocation4], 0
    // Predicated region
    $region2: #{_generator_forward_grouped.1} parent=1 // pred_check
      _
    $region3: #{_generator_forward_grouped.1} parent=1 // pred_check_branch
      %22 = sbr.rel (0) target = $region5
    $region4: #{_generator_forward_grouped.1} parent=1 // pred_region
      _
    $region5: #{_generator_forward_grouped.1} parent=1 // pred_fallthru
      _
    // Predicated region
    $region6: #{_generator_forward_grouped.1} parent=1 // pred_check
      _
    $region7: #{_generator_forward_grouped.1} parent=1 // pred_check_branch
      %24 = sbr.rel (0) target = $region9
    $region8: #{_generator_forward_grouped.1} parent=1 // pred_region
      _
    $region9: #{_generator_forward_grouped.1} parent=1 // pred_fallthru
      _
    // Predicated region
    $region10: #{_generator_forward_grouped.1} parent=1 // pred_check
      _
    $region11: #{_generator_forward_grouped.1} parent=1 // pred_check_branch
      %26 = sbr.rel (0) target = $region13
    $region12: #{_generator_forward_grouped.1} parent=1 // pred_region
      _
    $region13: #{_generator_forward_grouped.1} parent=1 // pred_fallthru
      _
    // Predicated region
    $region14: #{_generator_forward_grouped.1} parent=1 // pred_check
      _
    $region15: #{_generator_forward_grouped.1} parent=1 // pred_check_branch
      %28 = sbr.rel (0) target = $region17
    $region16: #{_generator_forward_grouped.1} parent=1 // pred_region
      _
    $region17: #{_generator_forward_grouped.1} parent=1 // pred_fallthru
      _
    // Predicated region
    $region18: #{_generator_forward_grouped.1} parent=1 // pred_check
      _
    $region19: #{_generator_forward_grouped.1} parent=1 // pred_check_branch
      %30 = sbr.rel (0) target = $region21
    $region20: #{_generator_forward_grouped.1} parent=1 // pred_region
      _
    $region21: #{_generator_forward_grouped.1} parent=1 // pred_fallthru
      _
    // Predicated region
    $region22: #{_generator_forward_grouped.1} parent=1 // pred_check
      _
    $region23: #{_generator_forward_grouped.1} parent=1 // pred_check_branch
      %32 = sbr.rel (0) target = $region25
    $region24: #{_generator_forward_grouped.1} parent=1 // pred_region
      _
    $region25: #{_generator_forward_grouped.1} parent=1 // pred_fallthru
      _
    // Predicated region
    $region26: #{_generator_forward_grouped.1} parent=1 // pred_check
      _
    $region27: #{_generator_forward_grouped.1} parent=1 // pred_check_branch
      %34 = sbr.rel (0) target = $region29
    $region28: #{_generator_forward_grouped.1} parent=1 // pred_region
      %s36 = ssub.s32 2048, 2048
      %37 = vsyncadd [#allocation3], %s36
      %s38 = sshll.u32 [#allocation2], 4
      %s39 = int_to_ptr.vmem [resolvable:$true] %s38
      %44 = dma.hbm_to_vmem [thread:$0]  %s6, 2048, %s39, [#allocation3], 64, 64, 4
    $region29: #{_generator_forward_grouped.1} parent=1 // pred_fallthru
      _
    // Predicated region
    $region30: #{_generator_forward_grouped.1} parent=1 // pred_check
      _
    $region31: #{_generator_forward_grouped.1} parent=1 // pred_check_branch
      %46 = sbr.rel (0) target = $region33
    $region32: #{_generator_forward_grouped.1} parent=1 // pred_region
      _
    $region33: #{_generator_forward_grouped.1} parent=1 // pred_fallthru
      _
    // Predicated region
    $region34: #{_generator_forward_grouped.1} parent=1 // pred_check
      _
    $region35: #{_generator_forward_grouped.1} parent=1 // pred_check_branch
      %48 = sbr.rel (0) target = $region37
    $region36: #{_generator_forward_grouped.1} parent=1 // pred_region
      _
    $region37: #{_generator_forward_grouped.1} parent=1 // pred_fallthru
      _
    // Predicated region
    $region38: #{_generator_forward_grouped.1} parent=1 // pred_check
      _
    $region39: #{_generator_forward_grouped.1} parent=1 // pred_check_branch
      %50 = sbr.rel (0) target = $region41
    $region40: #{_generator_forward_grouped.1} parent=1 // pred_region
      %s52 = ssub.s32 2048, 2048
      %53 = vsyncadd [#allocation6], %s52
      %s54 = sshll.u32 [#allocation5], 4
      %s55 = int_to_ptr.vmem [resolvable:$true] %s54
      %60 = dma.hbm_to_vmem [thread:$0]  %s9, 2048, %s55, [#allocation6], 128, 128, 8
    $region41: #{_generator_forward_grouped.1} parent=1 // pred_fallthru
      _
    // Predicated region
    $region42: #{_generator_forward_grouped.1} parent=1 // pred_check
      _
    $region43: #{_generator_forward_grouped.1} parent=1 // pred_check_branch
      %62 = sbr.rel (0) target = $region45
    $region44: #{_generator_forward_grouped.1} parent=1 // pred_region
      _
    $region45: #{_generator_forward_grouped.1} parent=1 // pred_fallthru
      _
    // Predicated region
    $region46: #{_generator_forward_grouped.1} parent=1 // pred_check
      _
    $region47: #{_generator_forward_grouped.1} parent=1 // pred_check_branch
      %64 = sbr.rel (0) target = $region49
    $region48: #{_generator_forward_grouped.1} parent=1 // pred_region
      _
    $region49: #{_generator_forward_grouped.1} parent=1 // pred_fallthru
      _
    // Predicated region
    $region50: #{_generator_forward_grouped.1} parent=1 // pred_check
      _
    $region51: #{_generator_forward_grouped.1} parent=1 // pred_check_branch
      %66 = sbr.rel (0) target = $region53
    $region52: #{_generator_forward_grouped.1} parent=1 // pred_region
      %s68 = ssub.s32 2048, 2048
      %69 = vsyncadd [#allocation6], %s68
      %s70 = sshll.u32 [#allocation7], 4
      %s71 = int_to_ptr.vmem [resolvable:$true] %s70
      %76 = dma.hbm_to_vmem [thread:$0]  %s12, 2048, %s71, [#allocation6], 64, 64, 4
    $region53: #{_generator_forward_grouped.1} parent=1 // pred_fallthru
      _
    // Predicated region
    $region54: #{_generator_forward_grouped.1} parent=1 // pred_check
      _
    $region55: #{_generator_forward_grouped.1} parent=1 // pred_check_branch
      %78 = sbr.rel (0) target = $region57
    $region56: #{_generator_forward_grouped.1} parent=1 // pred_region
      %79 = dma.done [#allocation3], 2048
    $region57: #{_generator_forward_grouped.1} parent=1 // pred_fallthru
      _
    // Predicated region
    $region58: #{_generator_forward_grouped.1} parent=1 // pred_check
      _
    $region59: #{_generator_forward_grouped.1} parent=1 // pred_check_branch
      %81 = sbr.rel (0) target = $region61
    $region60: #{_generator_forward_grouped.1} parent=1 // pred_region
      %82 = dma.done [#allocation6], 2048
    $region61: #{_generator_forward_grouped.1} parent=1 // pred_fallthru
      _
    // Predicated region
    $region62: #{_generator_forward_grouped.1} parent=1 // pred_check
      _
    $region63: #{_generator_forward_grouped.1} parent=1 // pred_check_branch
      %84 = sbr.rel (0) target = $region65
    $region64: #{_generator_forward_grouped.1} parent=1 // pred_region
      %85 = dma.done [#allocation6], 2048
    $region65: #{_generator_forward_grouped.1} parent=1 // pred_fallthru
      _
    %v87 = vld [vmem:[%s0] sm:$0xf]
    %v88 = vld [vmem:[%s2] sm:$0xff]
    %v89 = vld [vmem:[%s2 + $0x8] sm:$0xff]
    %v90 = vld [vmem:[%s1] sm:$0xf]
    %v91 = vld [vmem:[%s3] sm:$0xff]
    %v92 = vld [vmem:[%s3 + $0x8] sm:$0xff]
    %v95 = vunpack.c.l.b16 %v91
    %v96 = vunpack.c.h.b16 %v91
    %v97 = vunpack.c.l.b16 %v92
    %v98 = vunpack.c.h.b16 %v92
    %v99 = vpack.c.b16 %v97, %v95
    %v100 = vpack.c.b16 %v98, %v96
    %vm103 = vcmask 130048
    %v105 = vsel %vm103, %v90, 0
    %107 = vmatprep.subr.bf16.mxu0 %v100
    %108 = vmatpush1.bf16.msra.mxu0 %v99
    %109 = vmatprep.subr.bf16.mxu0 0
    %110 = vmatpush1.bf16.msra.mxu0 0
    %111 = vmatprep.subr.bf16.mxu0 0
    %112 = vmatpush1.bf16.msra.mxu0 0
    %113 = vmatprep.subr.bf16.mxu0 0
    %114 = vmatpush1.bf16.msra.mxu0 0
    %115 = vmatprep.subr.bf16.mxu0 0
    %116 = vmatpush1.bf16.msra.mxu0 0
    %117 = vmatprep.subr.bf16.mxu0 0
    %118 = vmatpush1.bf16.msra.mxu0 0
    %119 = vmatprep.subr.bf16.mxu0 0
    %120 = vmatpush1.bf16.msra.mxu0 0
    %121 = vmatprep.subr.bf16.mxu0 0
    %122 = vmatpush1.bf16.msra.mxu0 0
    %123 = vmatprep.subr.bf16.mxu0 0
    %124 = vmatpush1.bf16.msra.mxu0 0
    %125 = vmatprep.subr.bf16.mxu0 0
    %126 = vmatpush1.bf16.msra.mxu0 0
    %127 = vmatprep.subr.bf16.mxu0 0
    %128 = vmatpush1.bf16.msra.mxu0 0
    %129 = vmatprep.subr.bf16.mxu0 0
    %130 = vmatpush1.bf16.msra.mxu0 0
    %131 = vmatprep.subr.bf16.mxu0 0
    %132 = vmatpush1.bf16.msra.mxu0 0
    %133 = vmatprep.subr.bf16.mxu0 0
    %134 = vmatpush1.bf16.msra.mxu0 0
    %135 = vmatprep.subr.bf16.mxu0 0
    %136 = vmatpush1.bf16.msra.mxu0 0
    %137 = vmatprep.subr.bf16.mxu0 0
    %138 = vmatpush1.bf16.msra.mxu0 0
    %139 = vmatprep.mubr.bf16.mxu0 0
    %140 = vmatmul.mubr.bf16.gmra.mrb[0].mxu0 %v105
    %v141 = vpop.f32.mrb[0].mxu0
    %v142 = vadd.f32 0.0, %v141
    %v143 = vpop.f32.mrb[0].mxu0
    %v144 = vadd.f32 0.0, %v143
    %v145 = vpop.f32.mrb[0].mxu0
    %v146 = vpop.f32.mrb[0].mxu0
    %147 = vdwg.mxu0
    %v150 = vunpack.c.l.b16 %v88
    %v151 = vunpack.c.h.b16 %v88
    %v152 = vunpack.c.l.b16 %v89
    %v153 = vunpack.c.h.b16 %v89
    %v154 = vpack.c.b16 %v152, %v150
    %v155 = vpack.c.b16 %v153, %v151
    %v159 = vsel %vm103, %v87, 0
    %161 = vmatprep.subr.bf16.mxu0 %v155
    %162 = vmatpush1.bf16.msra.mxu0 %v154
    %163 = vmatprep.subr.bf16.mxu0 0
    %164 = vmatpush1.bf16.msra.mxu0 0
    %165 = vmatprep.subr.bf16.mxu0 0
    %166 = vmatpush1.bf16.msra.mxu0 0
    %167 = vmatprep.subr.bf16.mxu0 0
    %168 = vmatpush1.bf16.msra.mxu0 0
    %169 = vmatprep.subr.bf16.mxu0 0
    %170 = vmatpush1.bf16.msra.mxu0 0
    %171 = vmatprep.subr.bf16.mxu0 0
    %172 = vmatpush1.bf16.msra.mxu0 0
    %173 = vmatprep.subr.bf16.mxu0 0
    %174 = vmatpush1.bf16.msra.mxu0 0
    %175 = vmatprep.subr.bf16.mxu0 0
    %176 = vmatpush1.bf16.msra.mxu0 0
    %177 = vmatprep.subr.bf16.mxu0 0
    %178 = vmatpush1.bf16.msra.mxu0 0
    %179 = vmatprep.subr.bf16.mxu0 0
    %180 = vmatpush1.bf16.msra.mxu0 0
    %181 = vmatprep.subr.bf16.mxu0 0
    %182 = vmatpush1.bf16.msra.mxu0 0
    %183 = vmatprep.subr.bf16.mxu0 0
    %184 = vmatpush1.bf16.msra.mxu0 0
    %185 = vmatprep.subr.bf16.mxu0 0
    %186 = vmatpush1.bf16.msra.mxu0 0
    %187 = vmatprep.subr.bf16.mxu0 0
    %188 = vmatpush1.bf16.msra.mxu0 0
    %189 = vmatprep.subr.bf16.mxu0 0
    %190 = vmatpush1.bf16.msra.mxu0 0
    %191 = vmatprep.subr.bf16.mxu0 0
    %192 = vmatpush1.bf16.msra.mxu0 0
    %193 = vmatprep.mubr.bf16.mxu0 0
    %194 = vmatmul.mubr.bf16.gmra.mrb[0].mxu0 %v159
    %v195 = vpop.f32.mrb[0].mxu0
    %v196 = vadd.f32 %v142, %v195
    %v197 = vpop.f32.mrb[0].mxu0
    %v198 = vadd.f32 %v144, %v197
    %v199 = vpop.f32.mrb[0].mxu0
    %v200 = vpop.f32.mrb[0].mxu0
    %201 = vdwg.mxu0
    %v202 = vld [vmem:[%s4] sm:$0x3]
    %v203 = vld [vmem:[%s5] sm:$0x3]
    %v204 = vrot.slane %v196, 4
    %v205 = vadd.f32 %v196, %v204
    %v206 = vrot.slane %v205, 2
    %v207 = vadd.f32 %v205, %v206
    %v208 = vrot.slane %v207, 1
    %v209 = vadd.f32 %v207, %v208
    %v210 = vrot.slane %v198, 4
    %v211 = vadd.f32 %v198, %v210
    %v212 = vrot.slane %v211, 2
    %v213 = vadd.f32 %v211, %v212
    %v214 = vrot.slane %v213, 1
    %v215 = vadd.f32 %v213, %v214
    %v216 = vrcp.pop 8.0
    %v217 = vmul.f32 %v209, %v216
    %v218 = vmul.f32 %v215, %v216
    %v219 = vmul.f32 %v196, %v196
    %v220 = vmul.f32 %v198, %v198
    %v221 = vrot.slane %v219, 4
    %v222 = vadd.f32 %v219, %v221
    %v223 = vrot.slane %v222, 2
    %v224 = vadd.f32 %v222, %v223
    %v225 = vrot.slane %v224, 1
    %v226 = vadd.f32 %v224, %v225
    %v227 = vrot.slane %v220, 4
    %v228 = vadd.f32 %v220, %v227
    %v229 = vrot.slane %v228, 2
    %v230 = vadd.f32 %v228, %v229
    %v231 = vrot.slane %v230, 1
    %v232 = vadd.f32 %v230, %v231
    %v233 = vmul.f32 %v226, %v216
    %v234 = vmul.f32 %v232, %v216
    %v235 = vmul.f32 %v217, %v217
    %v236 = vmul.f32 %v218, %v218
    %v237 = vsub.f32 %v233, %v235
    %v238 = vsub.f32 %v234, %v236
    %v239 = vmax.f32 %v237, 0.0
    %v240 = vmax.f32 %v238, 0.0
    %v241 = vadd.f32 %v239, 0.8
    %v242 = vadd.f32 %v240, 0.8
    %v243 = vrsqrt.pop %v241
    %v244 = vrsqrt.pop %v242
    %v247 = vcombine.low %v243, %v244
    %v249 = vunpack.c.l.s4 1966171168
    %v250 = vunpack.c.0.s8 %v249
    %v251 = vlaneseq
    %v252 = vshrl.u32 %v251, 7
    %v253 = vsub.s32 %v250, %v252
    %v254 = vrot.slane %v247, %v253
    %v256 = vunpack.c.l.s4 1966171168
    %v257 = vunpack.c.0.s8 %v256
    %v258 = vlaneseq
    %v259 = vshrl.u32 %v258, 7
    %v260 = vsub.s32 %v257, %v259
    %v261 = vrot.slane %v254, %v260
    %v263 = vmul.f32 %v202, %v261
    %v265 = vlaneseq
    %v266 = vshrl.u32 %v265, 7
    %v267 = vsub.s32 0, %v266
    %v268 = vrot.slane %v263, %v267
    %v269 = vlaneseq
    %v270 = vshrl.u32 %v269, 7
    %v271 = vsub.s32 1, %v270
    %v272 = vrot.slane %v263, %v271
    %v275 = vmul.f32 %v217, %v268
    %v276 = vmul.f32 %v218, %v272
    %v279 = vcombine.low %v275, %v276
    %v281 = vunpack.c.l.s4 1966171168
    %v282 = vunpack.c.0.s8 %v281
    %v283 = vlaneseq
    %v284 = vshrl.u32 %v283, 7
    %v285 = vsub.s32 %v282, %v284
    %v286 = vrot.slane %v279, %v285
    %v288 = vunpack.c.l.s4 1966171168
    %v289 = vunpack.c.0.s8 %v288
    %v290 = vlaneseq
    %v291 = vshrl.u32 %v290, 7
    %v292 = vsub.s32 %v289, %v291
    %v293 = vrot.slane %v286, %v292
    %v295 = vsub.f32 %v203, %v293
    %v296 = vmul.f32 %v196, %v268
    %v297 = vmul.f32 %v198, %v272
    %v299 = vlaneseq
    %v300 = vshrl.u32 %v299, 7
    %v301 = vsub.s32 0, %v300
    %v302 = vrot.slane %v295, %v301
    %v303 = vlaneseq
    %v304 = vshrl.u32 %v303, 7
    %v305 = vsub.s32 1, %v304
    %v306 = vrot.slane %v295, %v305
    %v309 = vadd.f32 %v296, %v302
    %v310 = vadd.f32 %v297, %v306
    %v311 = vmul.f32 %v309, 0.25
    %v312 = vmul.f32 %v310, 0.25
    %v313 = vmax.f32 %v309, %v311
    %v314 = vmax.f32 %v310, %v312
    %v315 = vpack.c.bf16 %v313, %v313
    %v316 = vpack.c.bf16 %v314, %v314
    %v317 = vld [vmem:[#allocation2] sm:$0xf]
    %v318 = vld [vmem:[#allocation2 + $0x4] sm:$0xf]
    %v319 = vld [vmem:[#allocation2 + $0x8] sm:$0xf]
    %v320 = vld [vmem:[#allocation2 + $0xc] sm:$0xf]
    %v321 = vld [vmem:[#allocation2 + $0x10] sm:$0xf]
    %v322 = vld [vmem:[#allocation2 + $0x14] sm:$0xf]
    %v323 = vld [vmem:[#allocation2 + $0x18] sm:$0xf]
    %v324 = vld [vmem:[#allocation2 + $0x1c] sm:$0xf]
    %v325 = vld [vmem:[#allocation2 + $0x20] sm:$0xf]
    %v326 = vld [vmem:[#allocation2 + $0x24] sm:$0xf]
    %v327 = vld [vmem:[#allocation2 + $0x28] sm:$0xf]
    %v328 = vld [vmem:[#allocation2 + $0x2c] sm:$0xf]
    %v329 = vld [vmem:[#allocation2 + $0x30] sm:$0xf]
    %v330 = vld [vmem:[#allocation2 + $0x34] sm:$0xf]
    %v331 = vld [vmem:[#allocation2 + $0x38] sm:$0xf]
    %v332 = vld [vmem:[#allocation2 + $0x3c] sm:$0xf]
    %v333 = vld [vmem:[#allocation2 + $0x40] sm:$0xf]
    %v334 = vld [vmem:[#allocation2 + $0x44] sm:$0xf]
    %v335 = vld [vmem:[#allocation2 + $0x48] sm:$0xf]
    %v336 = vld [vmem:[#allocation2 + $0x4c] sm:$0xf]
    %v337 = vld [vmem:[#allocation2 + $0x50] sm:$0xf]
    %v338 = vld [vmem:[#allocation2 + $0x54] sm:$0xf]
    %v339 = vld [vmem:[#allocation2 + $0x58] sm:$0xf]
    %v340 = vld [vmem:[#allocation2 + $0x5c] sm:$0xf]
    %v341 = vld [vmem:[#allocation2 + $0x60] sm:$0xf]
    %v342 = vld [vmem:[#allocation2 + $0x64] sm:$0xf]
    %v343 = vld [vmem:[#allocation2 + $0x68] sm:$0xf]
    %v344 = vld [vmem:[#allocation2 + $0x6c] sm:$0xf]
    %v345 = vld [vmem:[#allocation2 + $0x70] sm:$0xf]
    %v346 = vld [vmem:[#allocation2 + $0x74] sm:$0xf]
    %v347 = vld [vmem:[#allocation2 + $0x78] sm:$0xf]
    %v348 = vld [vmem:[#allocation2 + $0x7c] sm:$0xf]
    %v381 = vunpack.c.l.b16 %v317
    %v382 = vunpack.c.l.b16 %v318
    %v383 = vunpack.c.l.b16 %v319
    %v384 = vunpack.c.l.b16 %v320
    %v385 = vunpack.c.l.b16 %v321
    %v386 = vunpack.c.l.b16 %v322
    %v387 = vunpack.c.l.b16 %v323
    %v388 = vunpack.c.l.b16 %v324
    %v389 = vunpack.c.l.b16 %v325
    %v390 = vunpack.c.l.b16 %v326
    %v391 = vunpack.c.l.b16 %v327
    %v392 = vunpack.c.l.b16 %v328
    %v393 = vunpack.c.l.b16 %v329
    %v394 = vunpack.c.l.b16 %v330
    %v395 = vunpack.c.l.b16 %v331
    %v396 = vunpack.c.l.b16 %v332
    %v397 = vunpack.c.l.b16 %v333
    %v398 = vunpack.c.l.b16 %v334
    %v399 = vunpack.c.l.b16 %v335
    %v400 = vunpack.c.l.b16 %v336
    %v401 = vunpack.c.l.b16 %v337
    %v402 = vunpack.c.l.b16 %v338
    %v403 = vunpack.c.l.b16 %v339
    %v404 = vunpack.c.l.b16 %v340
    %v405 = vunpack.c.l.b16 %v341
    %v406 = vunpack.c.l.b16 %v342
    %v407 = vunpack.c.l.b16 %v343
    %v408 = vunpack.c.l.b16 %v344
    %v409 = vunpack.c.l.b16 %v345
    %v410 = vunpack.c.l.b16 %v346
    %v411 = vunpack.c.l.b16 %v347
    %v412 = vunpack.c.l.b16 %v348
    %v413 = vpack.c.b16 %v382, %v381
    %v414 = vpack.c.b16 %v384, %v383
    %v415 = vpack.c.b16 %v386, %v385
    %v416 = vpack.c.b16 %v388, %v387
    %v417 = vpack.c.b16 %v390, %v389
    %v418 = vpack.c.b16 %v392, %v391
    %v419 = vpack.c.b16 %v394, %v393
    %v420 = vpack.c.b16 %v396, %v395
    %v421 = vpack.c.b16 %v398, %v397
    %v422 = vpack.c.b16 %v400, %v399
    %v423 = vpack.c.b16 %v402, %v401
    %v424 = vpack.c.b16 %v404, %v403
    %v425 = vpack.c.b16 %v406, %v405
    %v426 = vpack.c.b16 %v408, %v407
    %v427 = vpack.c.b16 %v410, %v409
    %v428 = vpack.c.b16 %v412, %v411
    %445 = vmatprep.subr.bf16.mxu0 0
    %446 = vmatpush1.bf16.msra.mxu0 %v413
    %447 = vmatprep.subr.bf16.mxu0 0
    %448 = vmatpush1.bf16.msra.mxu0 %v414
    %449 = vmatprep.subr.bf16.mxu0 0
    %450 = vmatpush1.bf16.msra.mxu0 %v415
    %451 = vmatprep.subr.bf16.mxu0 0
    %452 = vmatpush1.bf16.msra.mxu0 %v416
    %453 = vmatprep.subr.bf16.mxu0 0
    %454 = vmatpush1.bf16.msra.mxu0 %v417
    %455 = vmatprep.subr.bf16.mxu0 0
    %456 = vmatpush1.bf16.msra.mxu0 %v418
    %457 = vmatprep.subr.bf16.mxu0 0
    %458 = vmatpush1.bf16.msra.mxu0 %v419
    %459 = vmatprep.subr.bf16.mxu0 0
    %460 = vmatpush1.bf16.msra.mxu0 %v420
    %461 = vmatprep.subr.bf16.mxu0 0
    %462 = vmatpush1.bf16.msra.mxu0 %v421
    %463 = vmatprep.subr.bf16.mxu0 0
    %464 = vmatpush1.bf16.msra.mxu0 %v422
    %465 = vmatprep.subr.bf16.mxu0 0
    %466 = vmatpush1.bf16.msra.mxu0 %v423
    %467 = vmatprep.subr.bf16.mxu0 0
    %468 = vmatpush1.bf16.msra.mxu0 %v424
    %469 = vmatprep.subr.bf16.mxu0 0
    %470 = vmatpush1.bf16.msra.mxu0 %v425
    %471 = vmatprep.subr.bf16.mxu0 0
    %472 = vmatpush1.bf16.msra.mxu0 %v426
    %473 = vmatprep.subr.bf16.mxu0 0
    %474 = vmatpush1.bf16.msra.mxu0 %v427
    %475 = vmatprep.subr.bf16.mxu0 0
    %476 = vmatpush1.bf16.msra.mxu0 %v428
    %477 = vmatprep.mubr.bf16.mxu0 %v316
    %478 = vmatmul.mubr.bf16.gmra.mrb[0].mxu0 %v315
    %v479 = vpop.f32.mrb[0].mxu0
    %v480 = vadd.f32 0.0, %v479
    %v481 = vpop.f32.mrb[0].mxu0
    %v482 = vpop.f32.mrb[0].mxu0
    %v483 = vpop.f32.mrb[0].mxu0
    %484 = vdwg.mxu0
    %v485 = vld [vmem:[%s7] sm:$0x1]
    %v486 = vld [vmem:[%s8] sm:$0x1]
    %v487 = vrot.slane %v480, 4
    %v488 = vadd.f32 %v480, %v487
    %v489 = vrot.slane %v488, 2
    %v490 = vadd.f32 %v488, %v489
    %v491 = vrot.slane %v490, 1
    %v492 = vadd.f32 %v490, %v491
    %v493 = vmul.f32 %v492, %v216
    %v494 = vmul.f32 %v480, %v480
    %v495 = vrot.slane %v494, 4
    %v496 = vadd.f32 %v494, %v495
    %v497 = vrot.slane %v496, 2
    %v498 = vadd.f32 %v496, %v497
    %v499 = vrot.slane %v498, 1
    %v500 = vadd.f32 %v498, %v499
    %v501 = vmul.f32 %v500, %v216
    %v502 = vmul.f32 %v493, %v493
    %v503 = vsub.f32 %v501, %v502
    %v504 = vmax.f32 %v503, 0.0
    %v505 = vadd.f32 %v504, 0.8
    %v506 = vrsqrt.pop %v505
    %v507 = vmul.f32 %v485, %v506
    %v508 = vmul.f32 %v493, %v507
    %v509 = vsub.f32 %v486, %v508
    %v511 = vlaneseq
    %v512 = vshrl.u32 %v511, 7
    %v513 = vsub.s32 0, %v512
    %v514 = vrot.slane %v507, %v513
    %v516 = vmul.f32 %v480, %v514
    %v518 = vlaneseq
    %v519 = vshrl.u32 %v518, 7
    %v520 = vsub.s32 0, %v519
    %v521 = vrot.slane %v509, %v520
    %v523 = vadd.f32 %v516, %v521
    %v524 = vmul.f32 %v523, 0.25
    %v525 = vmax.f32 %v523, %v524
    %v526 = vpack.c.bf16 %v525, %v525
    %v527 = vld [vmem:[#allocation5] sm:$0xff]
    %v528 = vld [vmem:[#allocation5 + $0x8] sm:$0xff]
    %v529 = vld [vmem:[#allocation5 + $0x10] sm:$0xff]
    %v530 = vld [vmem:[#allocation5 + $0x18] sm:$0xff]
    %v531 = vld [vmem:[#allocation5 + $0x20] sm:$0xff]
    %v532 = vld [vmem:[#allocation5 + $0x28] sm:$0xff]
    %v533 = vld [vmem:[#allocation5 + $0x30] sm:$0xff]
    %v534 = vld [vmem:[#allocation5 + $0x38] sm:$0xff]
    %v535 = vld [vmem:[#allocation5 + $0x40] sm:$0xff]
    %v536 = vld [vmem:[#allocation5 + $0x48] sm:$0xff]
    %v537 = vld [vmem:[#allocation5 + $0x50] sm:$0xff]
    %v538 = vld [vmem:[#allocation5 + $0x58] sm:$0xff]
    %v539 = vld [vmem:[#allocation5 + $0x60] sm:$0xff]
    %v540 = vld [vmem:[#allocation5 + $0x68] sm:$0xff]
    %v541 = vld [vmem:[#allocation5 + $0x70] sm:$0xff]
    %v542 = vld [vmem:[#allocation5 + $0x78] sm:$0xff]
    %v559 = vunpack.c.l.b16 %v527
    %v560 = vunpack.c.h.b16 %v527
    %v561 = vunpack.c.l.b16 %v528
    %v562 = vunpack.c.h.b16 %v528
    %v563 = vunpack.c.l.b16 %v529
    %v564 = vunpack.c.h.b16 %v529
    %v565 = vunpack.c.l.b16 %v530
    %v566 = vunpack.c.h.b16 %v530
    %v567 = vunpack.c.l.b16 %v531
    %v568 = vunpack.c.h.b16 %v531
    %v569 = vunpack.c.l.b16 %v532
    %v570 = vunpack.c.h.b16 %v532
    %v571 = vunpack.c.l.b16 %v533
    %v572 = vunpack.c.h.b16 %v533
    %v573 = vunpack.c.l.b16 %v534
    %v574 = vunpack.c.h.b16 %v534
    %v575 = vunpack.c.l.b16 %v535
    %v576 = vunpack.c.h.b16 %v535
    %v577 = vunpack.c.l.b16 %v536
    %v578 = vunpack.c.h.b16 %v536
    %v579 = vunpack.c.l.b16 %v537
    %v580 = vunpack.c.h.b16 %v537
    %v581 = vunpack.c.l.b16 %v538
    %v582 = vunpack.c.h.b16 %v538
    %v583 = vunpack.c.l.b16 %v539
    %v584 = vunpack.c.h.b16 %v539
    %v585 = vunpack.c.l.b16 %v540
    %v586 = vunpack.c.h.b16 %v540
    %v587 = vunpack.c.l.b16 %v541
    %v588 = vunpack.c.h.b16 %v541
    %v589 = vunpack.c.l.b16 %v542
    %v590 = vunpack.c.h.b16 %v542
    %v591 = vpack.c.b16 %v561, %v559
    %v592 = vpack.c.b16 %v562, %v560
    %v593 = vpack.c.b16 %v565, %v563
    %v594 = vpack.c.b16 %v566, %v564
    %v595 = vpack.c.b16 %v569, %v567
    %v596 = vpack.c.b16 %v570, %v568
    %v597 = vpack.c.b16 %v573, %v571
    %v598 = vpack.c.b16 %v574, %v572
    %v599 = vpack.c.b16 %v577, %v575
    %v600 = vpack.c.b16 %v578, %v576
    %v601 = vpack.c.b16 %v581, %v579
    %v602 = vpack.c.b16 %v582, %v580
    %v603 = vpack.c.b16 %v585, %v583
    %v604 = vpack.c.b16 %v586, %v584
    %v605 = vpack.c.b16 %v589, %v587
    %v606 = vpack.c.b16 %v590, %v588
    %623 = vmatprep.subr.bf16.mxu0 %v592
    %624 = vmatpush1.bf16.msra.mxu0 %v591
    %625 = vmatprep.subr.bf16.mxu0 %v594
    %626 = vmatpush1.bf16.msra.mxu0 %v593
    %627 = vmatprep.subr.bf16.mxu0 %v596
    %628 = vmatpush1.bf16.msra.mxu0 %v595
    %629 = vmatprep.subr.bf16.mxu0 %v598
    %630 = vmatpush1.bf16.msra.mxu0 %v597
    %631 = vmatprep.subr.bf16.mxu0 %v600
    %632 = vmatpush1.bf16.msra.mxu0 %v599
    %633 = vmatprep.subr.bf16.mxu0 %v602
    %634 = vmatpush1.bf16.msra.mxu0 %v601
    %635 = vmatprep.subr.bf16.mxu0 %v604
    %636 = vmatpush1.bf16.msra.mxu0 %v603
    %637 = vmatprep.subr.bf16.mxu0 %v606
    %638 = vmatpush1.bf16.msra.mxu0 %v605
    %639 = vmatprep.subr.bf16.mxu0 0
    %640 = vmatpush1.bf16.msra.mxu0 0
    %641 = vmatprep.subr.bf16.mxu0 0
    %642 = vmatpush1.bf16.msra.mxu0 0
    %643 = vmatprep.subr.bf16.mxu0 0
    %644 = vmatpush1.bf16.msra.mxu0 0
    %645 = vmatprep.subr.bf16.mxu0 0
    %646 = vmatpush1.bf16.msra.mxu0 0
    %647 = vmatprep.subr.bf16.mxu0 0
    %648 = vmatpush1.bf16.msra.mxu0 0
    %649 = vmatprep.subr.bf16.mxu0 0
    %650 = vmatpush1.bf16.msra.mxu0 0
    %651 = vmatprep.subr.bf16.mxu0 0
    %652 = vmatpush1.bf16.msra.mxu0 0
    %653 = vmatprep.subr.bf16.mxu0 0
    %654 = vmatpush1.bf16.msra.mxu0 0
    %655 = vmatprep.mubr.bf16.mxu0 0
    %656 = vmatmul.mubr.bf16.gmra.mrb[0].mxu0 %v526
    %v657 = vpop.f32.mrb[0].mxu0
    %v658 = vadd.f32 0.0, %v657
    %v659 = vpop.f32.mrb[0].mxu0
    %v660 = vadd.f32 0.0, %v659
    %v661 = vpop.f32.mrb[0].mxu0
    %v662 = vpop.f32.mrb[0].mxu0
    %663 = vdwg.mxu0
    %v664 = vld [vmem:[%s10] sm:$0x3]
    %v665 = vld [vmem:[%s11] sm:$0x3]
    %v666 = vrot.slane %v658, 4
    %v667 = vadd.f32 %v658, %v666
    %v668 = vrot.slane %v667, 2
    %v669 = vadd.f32 %v667, %v668
    %v670 = vrot.slane %v669, 1
    %v671 = vadd.f32 %v669, %v670
    %v672 = vrot.slane %v660, 4
    %v673 = vadd.f32 %v660, %v672
    %v674 = vrot.slane %v673, 2
    %v675 = vadd.f32 %v673, %v674
    %v676 = vrot.slane %v675, 1
    %v677 = vadd.f32 %v675, %v676
    %v678 = vmul.f32 %v671, %v216
    %v679 = vmul.f32 %v677, %v216
    %v680 = vmul.f32 %v658, %v658
    %v681 = vmul.f32 %v660, %v660
    %v682 = vrot.slane %v680, 4
    %v683 = vadd.f32 %v680, %v682
    %v684 = vrot.slane %v683, 2
    %v685 = vadd.f32 %v683, %v684
    %v686 = vrot.slane %v685, 1
    %v687 = vadd.f32 %v685, %v686
    %v688 = vrot.slane %v681, 4
    %v689 = vadd.f32 %v681, %v688
    %v690 = vrot.slane %v689, 2
    %v691 = vadd.f32 %v689, %v690
    %v692 = vrot.slane %v691, 1
    %v693 = vadd.f32 %v691, %v692
    %v694 = vmul.f32 %v687, %v216
    %v695 = vmul.f32 %v693, %v216
    %v696 = vmul.f32 %v678, %v678
    %v697 = vmul.f32 %v679, %v679
    %v698 = vsub.f32 %v694, %v696
    %v699 = vsub.f32 %v695, %v697
    %v700 = vmax.f32 %v698, 0.0
    %v701 = vmax.f32 %v699, 0.0
    %v702 = vadd.f32 %v700, 0.8
    %v703 = vadd.f32 %v701, 0.8
    %v704 = vrsqrt.pop %v702
    %v705 = vrsqrt.pop %v703
    %v708 = vcombine.low %v704, %v705
    %v710 = vunpack.c.l.s4 1966171168
    %v711 = vunpack.c.0.s8 %v710
    %v712 = vlaneseq
    %v713 = vshrl.u32 %v712, 7
    %v714 = vsub.s32 %v711, %v713
    %v715 = vrot.slane %v708, %v714
    %v717 = vunpack.c.l.s4 1966171168
    %v718 = vunpack.c.0.s8 %v717
    %v719 = vlaneseq
    %v720 = vshrl.u32 %v719, 7
    %v721 = vsub.s32 %v718, %v720
    %v722 = vrot.slane %v715, %v721
    %v724 = vmul.f32 %v664, %v722
    %v726 = vlaneseq
    %v727 = vshrl.u32 %v726, 7
    %v728 = vsub.s32 0, %v727
    %v729 = vrot.slane %v724, %v728
    %v730 = vlaneseq
    %v731 = vshrl.u32 %v730, 7
    %v732 = vsub.s32 1, %v731
    %v733 = vrot.slane %v724, %v732
    %v736 = vmul.f32 %v678, %v729
    %v737 = vmul.f32 %v679, %v733
    %v740 = vcombine.low %v736, %v737
    %v742 = vunpack.c.l.s4 1966171168
    %v743 = vunpack.c.0.s8 %v742
    %v744 = vlaneseq
    %v745 = vshrl.u32 %v744, 7
    %v746 = vsub.s32 %v743, %v745
    %v747 = vrot.slane %v740, %v746
    %v749 = vunpack.c.l.s4 1966171168
    %v750 = vunpack.c.0.s8 %v749
    %v751 = vlaneseq
    %v752 = vshrl.u32 %v751, 7
    %v753 = vsub.s32 %v750, %v752
    %v754 = vrot.slane %v747, %v753
    %v756 = vsub.f32 %v665, %v754
    %v757 = vmul.f32 %v658, %v729
    %v758 = vmul.f32 %v660, %v733
    %v760 = vlaneseq
    %v761 = vshrl.u32 %v760, 7
    %v762 = vsub.s32 0, %v761
    %v763 = vrot.slane %v756, %v762
    %v764 = vlaneseq
    %v765 = vshrl.u32 %v764, 7
    %v766 = vsub.s32 1, %v765
    %v767 = vrot.slane %v756, %v766
    %v770 = vadd.f32 %v757, %v763
    %v771 = vadd.f32 %v758, %v767
    %v772 = vmul.f32 %v770, 0.25
    %v773 = vmul.f32 %v771, 0.25
    %v774 = vmax.f32 %v770, %v772
    %v775 = vmax.f32 %v771, %v773
    %v776 = vpack.c.bf16 %v774, %v774
    %v777 = vpack.c.bf16 %v775, %v775
    %v778 = vld [vmem:[#allocation7] sm:$0xf]
    %v779 = vld [vmem:[#allocation7 + $0x4] sm:$0xf]
    %v780 = vld [vmem:[#allocation7 + $0x8] sm:$0xf]
    %v781 = vld [vmem:[#allocation7 + $0xc] sm:$0xf]
    %v782 = vld [vmem:[#allocation7 + $0x10] sm:$0xf]
    %v783 = vld [vmem:[#allocation7 + $0x14] sm:$0xf]
    %v784 = vld [vmem:[#allocation7 + $0x18] sm:$0xf]
    %v785 = vld [vmem:[#allocation7 + $0x1c] sm:$0xf]
    %v786 = vld [vmem:[#allocation7 + $0x20] sm:$0xf]
    %v787 = vld [vmem:[#allocation7 + $0x24] sm:$0xf]
    %v788 = vld [vmem:[#allocation7 + $0x28] sm:$0xf]
    %v789 = vld [vmem:[#allocation7 + $0x2c] sm:$0xf]
    %v790 = vld [vmem:[#allocation7 + $0x30] sm:$0xf]
    %v791 = vld [vmem:[#allocation7 + $0x34] sm:$0xf]
    %v792 = vld [vmem:[#allocation7 + $0x38] sm:$0xf]
    %v793 = vld [vmem:[#allocation7 + $0x3c] sm:$0xf]
    %v794 = vld [vmem:[#allocation7 + $0x40] sm:$0xf]
    %v795 = vld [vmem:[#allocation7 + $0x44] sm:$0xf]
    %v796 = vld [vmem:[#allocation7 + $0x48] sm:$0xf]
    %v797 = vld [vmem:[#allocation7 + $0x4c] sm:$0xf]
    %v798 = vld [vmem:[#allocation7 + $0x50] sm:$0xf]
    %v799 = vld [vmem:[#allocation7 + $0x54] sm:$0xf]
    %v800 = vld [vmem:[#allocation7 + $0x58] sm:$0xf]
    %v801 = vld [vmem:[#allocation7 + $0x5c] sm:$0xf]
    %v802 = vld [vmem:[#allocation7 + $0x60] sm:$0xf]
    %v803 = vld [vmem:[#allocation7 + $0x64] sm:$0xf]
    %v804 = vld [vmem:[#allocation7 + $0x68] sm:$0xf]
    %v805 = vld [vmem:[#allocation7 + $0x6c] sm:$0xf]
    %v806 = vld [vmem:[#allocation7 + $0x70] sm:$0xf]
    %v807 = vld [vmem:[#allocation7 + $0x74] sm:$0xf]
    %v808 = vld [vmem:[#allocation7 + $0x78] sm:$0xf]
    %v809 = vld [vmem:[#allocation7 + $0x7c] sm:$0xf]
    %v842 = vunpack.c.l.b16 %v778
    %v843 = vunpack.c.l.b16 %v779
    %v844 = vunpack.c.l.b16 %v780
    %v845 = vunpack.c.l.b16 %v781
    %v846 = vunpack.c.l.b16 %v782
    %v847 = vunpack.c.l.b16 %v783
    %v848 = vunpack.c.l.b16 %v784
    %v849 = vunpack.c.l.b16 %v785
    %v850 = vunpack.c.l.b16 %v786
    %v851 = vunpack.c.l.b16 %v787
    %v852 = vunpack.c.l.b16 %v788
    %v853 = vunpack.c.l.b16 %v789
    %v854 = vunpack.c.l.b16 %v790
    %v855 = vunpack.c.l.b16 %v791
    %v856 = vunpack.c.l.b16 %v792
    %v857 = vunpack.c.l.b16 %v793
    %v858 = vunpack.c.l.b16 %v794
    %v859 = vunpack.c.l.b16 %v795
    %v860 = vunpack.c.l.b16 %v796
    %v861 = vunpack.c.l.b16 %v797
    %v862 = vunpack.c.l.b16 %v798
    %v863 = vunpack.c.l.b16 %v799
    %v864 = vunpack.c.l.b16 %v800
    %v865 = vunpack.c.l.b16 %v801
    %v866 = vunpack.c.l.b16 %v802
    %v867 = vunpack.c.l.b16 %v803
    %v868 = vunpack.c.l.b16 %v804
    %v869 = vunpack.c.l.b16 %v805
    %v870 = vunpack.c.l.b16 %v806
    %v871 = vunpack.c.l.b16 %v807
    %v872 = vunpack.c.l.b16 %v808
    %v873 = vunpack.c.l.b16 %v809
    %v874 = vpack.c.b16 %v843, %v842
    %v875 = vpack.c.b16 %v845, %v844
    %v876 = vpack.c.b16 %v847, %v846
    %v877 = vpack.c.b16 %v849, %v848
    %v878 = vpack.c.b16 %v851, %v850
    %v879 = vpack.c.b16 %v853, %v852
    %v880 = vpack.c.b16 %v855, %v854
    %v881 = vpack.c.b16 %v857, %v856
    %v882 = vpack.c.b16 %v859, %v858
    %v883 = vpack.c.b16 %v861, %v860
    %v884 = vpack.c.b16 %v863, %v862
    %v885 = vpack.c.b16 %v865, %v864
    %v886 = vpack.c.b16 %v867, %v866
    %v887 = vpack.c.b16 %v869, %v868
    %v888 = vpack.c.b16 %v871, %v870
    %v889 = vpack.c.b16 %v873, %v872
    %906 = vmatprep.subr.bf16.mxu0 0
    %907 = vmatpush1.bf16.msra.mxu0 %v874
    %908 = vmatprep.subr.bf16.mxu0 0
    %909 = vmatpush1.bf16.msra.mxu0 %v875
    %910 = vmatprep.subr.bf16.mxu0 0
    %911 = vmatpush1.bf16.msra.mxu0 %v876
    %912 = vmatprep.subr.bf16.mxu0 0
    %913 = vmatpush1.bf16.msra.mxu0 %v877
    %914 = vmatprep.subr.bf16.mxu0 0
    %915 = vmatpush1.bf16.msra.mxu0 %v878
    %916 = vmatprep.subr.bf16.mxu0 0
    %917 = vmatpush1.bf16.msra.mxu0 %v879
    %918 = vmatprep.subr.bf16.mxu0 0
    %919 = vmatpush1.bf16.msra.mxu0 %v880
    %920 = vmatprep.subr.bf16.mxu0 0
    %921 = vmatpush1.bf16.msra.mxu0 %v881
    %922 = vmatprep.subr.bf16.mxu0 0
    %923 = vmatpush1.bf16.msra.mxu0 %v882
    %924 = vmatprep.subr.bf16.mxu0 0
    %925 = vmatpush1.bf16.msra.mxu0 %v883
    %926 = vmatprep.subr.bf16.mxu0 0
    %927 = vmatpush1.bf16.msra.mxu0 %v884
    %928 = vmatprep.subr.bf16.mxu0 0
    %929 = vmatpush1.bf16.msra.mxu0 %v885
    %930 = vmatprep.subr.bf16.mxu0 0
    %931 = vmatpush1.bf16.msra.mxu0 %v886
    %932 = vmatprep.subr.bf16.mxu0 0
    %933 = vmatpush1.bf16.msra.mxu0 %v887
    %934 = vmatprep.subr.bf16.mxu0 0
    %935 = vmatpush1.bf16.msra.mxu0 %v888
    %936 = vmatprep.subr.bf16.mxu0 0
    %937 = vmatpush1.bf16.msra.mxu0 %v889
    %938 = vmatprep.mubr.bf16.mxu0 %v777
    %939 = vmatmul.mubr.bf16.gmra.mrb[0].mxu0 %v776
    %v940 = vpop.f32.mrb[0].mxu0
    %v941 = vadd.f32 0.0, %v940
    %v942 = vpop.f32.mrb[0].mxu0
    %v943 = vpop.f32.mrb[0].mxu0
    %v944 = vpop.f32.mrb[0].mxu0
    %945 = vdwg.mxu0
    %946 = vst [vmem:[#allocation8] sm:$0xff] %v941
    // Predicated region
    $region66: #{_generator_forward_grouped.1} parent=1 // pred_check
      _
    $region67: #{_generator_forward_grouped.1} parent=1 // pred_check_branch
      %948 = sbr.rel (0) target = $region69
    $region68: #{_generator_forward_grouped.1} parent=1 // pred_region
      %s950 = ssub.s32 128, 128
      %951 = vsyncadd [#allocation4], %s950
      %s953 = sshll.u32 [#allocation8], 4
      %s954 = int_to_ptr.vmem [resolvable:$true] %s953
      %956 = dma.vmem_to_hbm [thread:$0]  %s954, 128, %s13, [#allocation4]
    $region69: #{_generator_forward_grouped.1} parent=1 // pred_fallthru
      _
    // Predicated region
    $region70: #{_generator_forward_grouped.1} parent=1 // pred_check
      _
    $region71: #{_generator_forward_grouped.1} parent=1 // pred_check_branch
      %958 = sbr.rel (0) target = $region73
    $region72: #{_generator_forward_grouped.1} parent=1 // pred_region
      %959 = dma.done [#allocation4], 128
    $region73: #{_generator_forward_grouped.1} parent=1 // pred_fallthru
      _
    %960 = vsyncpa [#allocation3], 1
    %961 = vsyncpa [#allocation6], 1
    %962 = vsyncpa [#allocation4], 1

</llo_original>
